<compile_context>
chip_gen: v7x
topology: tpu7x:2x2x1
jax: 0.10.0
libtpu: 0.0.40
codegen_flags: <defaults>
</compile_context>

<pallas_src>
import math

import jax
import jax.numpy as jnp
from jax.experimental import pallas as pl
from jax.experimental.pallas import tpu as pltpu


def _round_up(x, m):
    return ((x + m - 1) // m) * m


def _cdiv(a, b):
    return (a + b - 1) // b


def _vmem_capacity_bytes():
    """Physical per-core VMEM (128 MiB v5e/v6e, 64 MiB v7x); conservative fallback."""
    try:
        return int(pltpu.get_tpu_info().vmem_capacity_bytes)
    except Exception:
        return 64 << 20


def _choose_inner_chunk(width, target):
    """Largest 128-multiple divisor of `width` that is <= target (else width itself)."""
    if width <= target:
        return width
    c = (target // 128) * 128
    while c >= 128:
        if width % c == 0:
            return c
        c -= 128
    return width


def _gelu_exact(h):
    # nn.GELU() default: 0.5*x*(1 + erf(x/sqrt(2)))
    return 0.5 * h * (1.0 + jax.lax.erf(h * (1.0 / math.sqrt(2.0))))


def _gelu_tanh(h):
    # tanh approximation -> EUP slot; slight numeric divergence vs exact erf.
    c = math.sqrt(2.0 / math.pi)
    return 0.5 * h * (1.0 + jnp.tanh(c * (h + 0.044715 * h * h * h)))


def _make_ffn_kernel(tk_inner, gelu_fn):
    """Kernel over one (tm, n_embd) row tile and one (.., tk_grid) K block."""

    def kernel(x_ref, w1_ref, b1_ref, w2_ref, b2_ref, o_ref, acc_ref):
        k = pl.program_id(1)

        @pl.when(k == 0)
        def _():
            acc_ref[...] = jnp.zeros_like(acc_ref)

        x = x_ref[...]
        n_chunks = w1_ref.shape[1] // tk_inner  # static (tk_inner divides block width)

        def chunk(off):
            w1c = w1_ref[:, pl.ds(off, tk_inner)]
            b1c = b1_ref[:, pl.ds(off, tk_inner)]
            h = jnp.dot(x, w1c, preferred_element_type=jnp.float32)
            h = h + b1c.astype(jnp.float32)
            h = gelu_fn(h)
            # dropout: identity in eval mode (see TODO at top of file).
            w2c = w2_ref[pl.ds(off, tk_inner), :]
            acc_ref[...] += jnp.dot(h.astype(w2c.dtype), w2c,
                                    preferred_element_type=jnp.float32)

        if n_chunks == 1:
            chunk(0)
        else:
            def body(c, carry):
                chunk(pl.multiple_of(c * tk_inner, tk_inner))
                return carry
            jax.lax.fori_loop(0, n_chunks, body, 0, unroll=(n_chunks <= 8))

        @pl.when(k == pl.num_programs(1) - 1)
        def _():
            y = acc_ref[...] + b2_ref[...].astype(jnp.float32)
            o_ref[...] = y.astype(o_ref.dtype)

    return kernel


def feed_forward_network(x, w1, b1, w2, b2, *, tm=512, inner_chunk=512,
                         compute_dtype=None, gelu_approximate=False):
    """x: (B, T, n_embd) -> (B, T, n_embd). Fused fc1 -> GELU -> fc2 (eval-mode dropout).

    Weights are (in_features, out_features) (transpose of torch Linear.weight).
    compute_dtype=jnp.bfloat16 casts x/W1/W2 for the native bf16 MXU path.
    """
    B, T, n_embd = x.shape
    n_inner = w1.shape[1]
    M = B * T
    out_dtype = x.dtype

    if compute_dtype is not None:
        x = x.astype(compute_dtype)
        w1 = w1.astype(compute_dtype)
        w2 = w2.astype(compute_dtype)

    x2d = x.reshape(M, n_embd)
    b1_2d = b1.reshape(1, n_inner)
    b2_2d = b2.reshape(1, n_embd)

    x_isz = jnp.dtype(x2d.dtype).itemsize
    w_isz = jnp.dtype(w1.dtype).itemsize
    b_isz = jnp.dtype(b1.dtype).itemsize

    # Row tile: large (512 keeps the MXU M-dimension full on all generations),
    # never larger than the 8-aligned row count. Ragged last block is masked
    # by Pallas (no pad / slice HBM passes).
    tm_eff = int(min(tm, _round_up(M, 8)))
    m_tiles = _cdiv(M, tm_eff)

    # Per-generation VMEM budget (v5e/v6e: ~112 MiB usable, v7x: ~48 MiB).
    cap = _vmem_capacity_bytes()
    hard_cap = max(cap - (12 << 20), 24 << 20)   # leave Mosaic-internal headroom
    budget = max(hard_cap - (4 << 20), 20 << 20)  # planning margin

    def need_bytes(tk_grid, streaming):
        wbuf = 2 if streaming else 1              # streamed weights double-buffered
        tk_i = _choose_inner_chunk(tk_grid, inner_chunk)
        return (wbuf * (n_embd * tk_grid + tk_grid * n_embd + tk_grid) * w_isz
                + n_embd * b_isz                  # b2 resident
                + 4 * tm_eff * n_embd * x_isz     # x + out tiles, double-buffered
                + tm_eff * n_embd * 4             # f32 accumulator scratch
                + tm_eff * tk_i * 4)              # f32 chunk intermediate

    # Pick resident weights when they fit; otherwise stream n_inner on the grid.
    if need_bytes(n_inner, streaming=False) <= budget:
        tk_grid, streaming = n_inner, False
    else:
        tk_grid, streaming = n_inner, False       # fallback: resident, maxed limit
        for cand in (4096, 2048, 1024, 512, 256, 128):
            if cand < n_inner and n_inner % cand == 0 and need_bytes(cand, True) <= budget:
                tk_grid, streaming = cand, True
                break
        # TODO(synk): if n_inner has no 128-aligned divisor that fits, pad
        # n_inner with zero columns/rows instead of staying resident.

    tk_inner = _choose_inner_chunk(tk_grid, inner_chunk)
    k_tiles = n_inner // tk_grid

    vmem_limit = int(min(hard_cap,
                         max(int(need_bytes(tk_grid, streaming) * 1.25) + (2 << 20),
                             32 << 20)))

    gelu_fn = _gelu_tanh if gelu_approximate else _gelu_exact
    kernel = _make_ffn_kernel(tk_inner, gelu_fn)

    # Constant-index operands don't need double-buffering.
    resident = dict(pipeline_mode=pl.Buffered(buffer_count=1))
    w_mode = {} if streaming else resident

    weight_bytes = (w1.size + w2.size) * w_isz + (b1.size + b2.size) * b_isz
    cost = pl.CostEstimate(
        flops=4 * M * n_embd * n_inner,                 # two MXU matmuls
        transcendentals=M * n_inner,                    # one erf/tanh per hidden elem
        bytes_accessed=int(2 * M * n_embd * x_isz
                           + weight_bytes * (m_tiles if streaming else 1)),
    )

    out2d = pl.pallas_call(
        kernel,
        out_shape=jax.ShapeDtypeStruct((M, n_embd), out_dtype),
        grid_spec=pltpu.PrefetchScalarGridSpec(
            num_scalar_prefetch=0,
            grid=(m_tiles, k_tiles),
            in_specs=[
                pl.BlockSpec((tm_eff, n_embd), lambda i, k: (i, 0)),              # x tile
                pl.BlockSpec((n_embd, tk_grid), lambda i, k: (0, k), **w_mode),   # W1
                pl.BlockSpec((1, tk_grid), lambda i, k: (0, k), **w_mode),        # b1
                pl.BlockSpec((tk_grid, n_embd), lambda i, k: (k, 0), **w_mode),   # W2
                pl.BlockSpec((1, n_embd), lambda i, k: (0, 0), **resident),       # b2
            ],
            out_specs=pl.BlockSpec((tm_eff, n_embd), lambda i, k: (i, 0)),
            scratch_shapes=[pltpu.VMEM((tm_eff, n_embd), jnp.float32)],
        ),
        compiler_params=pltpu.CompilerParams(
            dimension_semantics=("parallel", "arbitrary"),  # rows shard across TCs
            vmem_limit_bytes=vmem_limit,
        ),
        cost_estimate=cost,
    )(x2d, w1, b1_2d, w2, b2_2d)

    return out2d.reshape(B, T, n_embd)


def ffn_reference(x, w1, b1, w2, b2):
    """Plain-JAX reference (exact-erf GELU, dropout = identity in eval)."""
    hp = jax.lax.Precision.HIGHEST
    h = jnp.dot(x, w1, precision=hp) + b1
    h = 0.5 * h * (1.0 + jax.lax.erf(h * (1.0 / math.sqrt(2.0))))
    return jnp.dot(h, w2, precision=hp) + b2


def init_params(key, n_embd, n_inner, dtype=jnp.float32):
    """Deterministic init mimicking torch nn.Linear default U(-1/sqrt(fan_in), 1/sqrt(fan_in))."""
    k1, k2, k3, k4 = jax.random.split(key, 4)
    bound1 = 1.0 / math.sqrt(n_embd)
    bound2 = 1.0 / math.sqrt(n_inner)
    w1 = jax.random.uniform(k1, (n_embd, n_inner), dtype, -bound1, bound1)
    b1 = jax.random.uniform(k2, (n_inner,), dtype, -bound1, bound1)
    w2 = jax.random.uniform(k3, (n_inner, n_embd), dtype, -bound2, bound2)
    b2 = jax.random.uniform(k4, (n_embd,), dtype, -bound2, bound2)
    return w1, b1, w2, b2


if __name__ == "__main__":
    # Small GPT-1-ish shapes: batch=2, seq=8, n_embd=32, n_inner=4*n_embd=128
    B, T, n_embd = 2, 8, 32
    n_inner = 4 * n_embd

    key = jax.random.PRNGKey(0)
    kx, kp = jax.random.split(key)
    x = jax.random.normal(kx, (B, T, n_embd), jnp.float32)
    w1, b1, w2, b2 = init_params(kp, n_embd, n_inner)

    out = jax.block_until_ready(feed_forward_network(x, w1, b1, w2, b2))
    ref = ffn_reference(x, w1, b1, w2, b2)
    assert jnp.allclose(out, ref, atol=1e-5, rtol=1e-5), "mismatch vs reference"

    # Ragged last block path (M = 10 not tile-aligned; no pad / slice passes).
    x_odd = jax.random.normal(kx, (2, 5, n_embd), jnp.float32)
    out_odd = jax.block_until_ready(feed_forward_network(x_odd, w1, b1, w2, b2))
    ref_odd = ffn_reference(x_odd, w1, b1, w2, b2)
    assert jnp.allclose(out_odd, ref_odd, atol=1e-5, rtol=1e-5), "mismatch (ragged rows)"

    # Exercise the in-kernel n_inner chunk loop (n_inner > inner_chunk -> 2 chunks).
    kx2, kp2 = jax.random.split(jax.random.PRNGKey(1))
    x3 = jax.random.normal(kx2, (2, 40, 64), jnp.float32)
    p3 = init_params(kp2, 64, 1024)
    out3 = jax.block_until_ready(feed_forward_network(x3, *p3))
    ref3 = ffn_reference(x3, *p3)
    assert jnp.allclose(out3, ref3, atol=1e-4, rtol=1e-4), "mismatch (chunked n_inner)"

    # Optional bf16 MXU fast path (loose tolerance: bf16 mantissa).
    out_bf = jax.block_until_ready(
        feed_forward_network(x, w1, b1, w2, b2, compute_dtype=jnp.bfloat16))
    assert jnp.allclose(out_bf, ref, atol=5e-2, rtol=5e-2), "mismatch (bf16 path)"

    print("KERNEL_OK")
</pallas_src>

<mosaic_0001>
module attributes {stable_mosaic.version = 11 : i64} {
  func.func @kernel(%arg0: i32, %arg1: i32, %arg2: memref<16x32xf32, #tpu.memory_space<vmem>>, %arg3: memref<32x128xf32, #tpu.memory_space<vmem>>, %arg4: memref<1x128xf32, #tpu.memory_space<vmem>>, %arg5: memref<128x32xf32, #tpu.memory_space<vmem>>, %arg6: memref<1x32xf32, #tpu.memory_space<vmem>>, %arg7: memref<16x32xf32, #tpu.memory_space<vmem>>, %arg8: memref<16x32xf32, #tpu.memory_space<vmem>>) attributes {dimension_semantics = [#tpu.dimension_semantics<parallel>, #tpu.dimension_semantics<arbitrary>], iteration_bounds = array<i64: 1, 1>, scalar_prefetch = 0 : i64, scratch_operands = 1 : i64, tpu.core_type = #tpu.core_type<tc>, window_params = [{transform_indices = @transform_0, window_bounds = array<i64: 16, 32>}, {pipeline_mode = #tpu.pipeline_mode<synchronous>, transform_indices = @transform_1, window_bounds = array<i64: 32, 128>}, {pipeline_mode = #tpu.pipeline_mode<synchronous>, transform_indices = @transform_2, window_bounds = array<i64: 1, 128>}, {pipeline_mode = #tpu.pipeline_mode<synchronous>, transform_indices = @transform_3, window_bounds = array<i64: 128, 32>}, {pipeline_mode = #tpu.pipeline_mode<synchronous>, transform_indices = @transform_4, window_bounds = array<i64: 1, 32>}, {transform_indices = @transform_5, window_bounds = array<i64: 16, 32>}]} {
    %c0_i32 = arith.constant 0 : i32
    %0 = arith.cmpi eq, %arg1, %c0_i32 : i32
    %1 = arith.extui %0 : i1 to i32
    %c0_i32_0 = arith.constant 0 : i32
    %2 = arith.cmpi ne, %1, %c0_i32_0 : i32
    scf.if %2 {
      %cst_18 = arith.constant 0.000000e+00 : f32
      %25 = vector.broadcast %cst_18 : f32 to vector<16x32xf32>
      %c0_19 = arith.constant 0 : index
      %c0_20 = arith.constant 0 : index
      %26 = vector.load %arg8[%c0_19, %c0_20] : memref<16x32xf32, #tpu.memory_space<vmem>>, vector<16x32xf32>
      tpu.vector_store %arg8[%c0_19, %c0_20], %25 {strides = array<i32>} : memref<16x32xf32, #tpu.memory_space<vmem>>, vector<16x32xf32>,
    } else {
    }
    %c0 = arith.constant 0 : index
    %c0_1 = arith.constant 0 : index
    %3 = vector.load %arg2[%c0, %c0_1] : memref<16x32xf32, #tpu.memory_space<vmem>>, vector<16x32xf32>
    %c0_2 = arith.constant 0 : index
    %c0_3 = arith.constant 0 : index
    %4 = vector.load %arg3[%c0_2, %c0_3] : memref<32x128xf32, #tpu.memory_space<vmem>>, vector<32x128xf32>
    %c0_4 = arith.constant 0 : index
    %c0_5 = arith.constant 0 : index
    %5 = vector.load %arg4[%c0_4, %c0_5] : memref<1x128xf32, #tpu.memory_space<vmem>>, vector<1x128xf32>
    %cst = arith.constant dense<0.000000e+00> : vector<16x128xf32>
    %6 = tpu.matmul %3, %4, %cst {dimension_numbers = #tpu.dot_dimension_numbers<[1], [0], [0], [1], [0, 0, 1, 1], [], []>} : vector<16x32xf32>, vector<32x128xf32>, vector<16x128xf32> -> vector<16x128xf32>
    %7 = vector.broadcast %5 : vector<1x128xf32> to vector<16x128xf32>
    %8 = arith.addf %6, %7 : vector<16x128xf32>
    %cst_6 = arith.constant 5.000000e-01 : f32
    %9 = vector.broadcast %cst_6 : f32 to vector<16x128xf32>
    %10 = arith.mulf %9, %8 : vector<16x128xf32>
    %cst_7 = arith.constant 0.707106769 : f32
    %11 = vector.broadcast %cst_7 : f32 to vector<16x128xf32>
    %12 = arith.mulf %8, %11 : vector<16x128xf32>
    %13 = math.erf %12 : vector<16x128xf32>
    %cst_8 = arith.constant 1.000000e+00 : f32
    %14 = vector.broadcast %cst_8 : f32 to vector<16x128xf32>
    %15 = arith.addf %14, %13 : vector<16x128xf32>
    %16 = arith.mulf %10, %15 : vector<16x128xf32>
    %c0_9 = arith.constant 0 : index
    %c0_10 = arith.constant 0 : index
    %17 = vector.load %arg5[%c0_9, %c0_10] : memref<128x32xf32, #tpu.memory_space<vmem>>, vector<128x32xf32>
    %c0_11 = arith.constant 0 : index
    %c0_12 = arith.constant 0 : index
    %18 = vector.load %arg8[%c0_11, %c0_12] : memref<16x32xf32, #tpu.memory_space<vmem>>, vector<16x32xf32>
    %cst_13 = arith.constant dense<0.000000e+00> : vector<16x32xf32>
    %19 = tpu.matmul %16, %17, %cst_13 {dimension_numbers = #tpu.dot_dimension_numbers<[1], [0], [0], [1], [0, 0, 1, 1], [], []>} : vector<16x128xf32>, vector<128x32xf32>, vector<16x32xf32> -> vector<16x32xf32>
    %20 = arith.addf %18, %19 : vector<16x32xf32>
    %c0_14 = arith.constant 0 : index
    %c0_15 = arith.constant 0 : index
    %21 = vector.load %arg8[%c0_14, %c0_15] : memref<16x32xf32, #tpu.memory_space<vmem>>, vector<16x32xf32>
    tpu.vector_store %arg8[%c0_14, %c0_15], %20 {strides = array<i32>} : memref<16x32xf32, #tpu.memory_space<vmem>>, vector<16x32xf32>,
    %c0_i32_16 = arith.constant 0 : i32
    %22 = arith.cmpi eq, %arg1, %c0_i32_16 : i32
    %23 = arith.extui %22 : i1 to i32
    %c0_i32_17 = arith.constant 0 : i32
    %24 = arith.cmpi ne, %23, %c0_i32_17 : i32
    scf.if %24 {
      %c0_18 = arith.constant 0 : index
      %c0_19 = arith.constant 0 : index
      %25 = vector.load %arg8[%c0_18, %c0_19] : memref<16x32xf32, #tpu.memory_space<vmem>>, vector<16x32xf32>
      %c0_20 = arith.constant 0 : index
      %c0_21 = arith.constant 0 : index
      %26 = vector.load %arg6[%c0_20, %c0_21] : memref<1x32xf32, #tpu.memory_space<vmem>>, vector<1x32xf32>
      %27 = vector.broadcast %26 : vector<1x32xf32> to vector<16x32xf32>
      %28 = arith.addf %25, %27 : vector<16x32xf32>
      %c0_22 = arith.constant 0 : index
      %c0_23 = arith.constant 0 : index
      %29 = vector.load %arg7[%c0_22, %c0_23] : memref<16x32xf32, #tpu.memory_space<vmem>>, vector<16x32xf32>
      tpu.vector_store %arg7[%c0_22, %c0_23], %28 {strides = array<i32>} : memref<16x32xf32, #tpu.memory_space<vmem>>, vector<16x32xf32>,
    } else {
    }
    return
  }
  func.func @transform_0(%arg0: i32, %arg1: i32) -> (i32, i32) {
    %c0_i32 = arith.constant 0 : i32
    %c0_i32_0 = arith.constant 0 : i32
    return %arg0, %c0_i32 : i32, i32
  }
  func.func @transform_1(%arg0: i32, %arg1: i32) -> (i32, i32) {
    %c0_i32 = arith.constant 0 : i32
    %c0_i32_0 = arith.constant 0 : i32
    return %c0_i32, %arg1 : i32, i32
  }
  func.func @transform_2(%arg0: i32, %arg1: i32) -> (i32, i32) {
    %c0_i32 = arith.constant 0 : i32
    %c0_i32_0 = arith.constant 0 : i32
    return %c0_i32, %arg1 : i32, i32
  }
  func.func @transform_3(%arg0: i32, %arg1: i32) -> (i32, i32) {
    %c0_i32 = arith.constant 0 : i32
    %c0_i32_0 = arith.constant 0 : i32
    return %arg1, %c0_i32 : i32, i32
  }
  func.func @transform_4(%arg0: i32, %arg1: i32) -> (i32, i32) {
    %c0_i32 = arith.constant 0 : i32
    %c0_i32_0 = arith.constant 0 : i32
    %c0_i32_1 = arith.constant 0 : i32
    return %c0_i32, %c0_i32_0 : i32, i32
  }
  func.func @transform_5(%arg0: i32, %arg1: i32) -> (i32, i32) {
    %c0_i32 = arith.constant 0 : i32
    %c0_i32_0 = arith.constant 0 : i32
    return %arg0, %c0_i32 : i32, i32
  }
}

</mosaic_0001>

<llo_original>
// kernel: tpu_custom_call.1
$region0: #{tpu_custom_call.1}
  #allocation0 [shape = 'u32[]', space=smem, size = 0x4, offset = 0x4, fixed_abs, tag = 'smem constant byte address 0x4 - core index']
  #allocation1 [shape = 'u32[144,128]{1,0:T(1,128)}', space=vmem, size = 0x12000, scoped, tag = 'internal scratch']
  #allocation2 [shape = 'f32[16,32]{1,0:T(8,128)}', space=vmem, size = 0x2000, scoped, tag = 'scratch operand']
  %s0 = inlined_call_operand.vmem [shape: f32[16,32], index: 0, kind: input, shape index: {}]
  %s1 = inlined_call_operand.vmem [shape: f32[32,128], index: 1, kind: input, shape index: {}]
  %s2 = inlined_call_operand.vmem [shape: f32[1,128], index: 2, kind: input, shape index: {}]
  %s3 = inlined_call_operand.vmem [shape: f32[128,32], index: 3, kind: input, shape index: {}]
  %s4 = inlined_call_operand.vmem [shape: f32[1,32], index: 4, kind: input, shape index: {}]
  %s5 = inlined_call_operand.hbm [shape: f32[16,32], index: 5, kind: output, shape index: {}]
  %s6 = sld [smem:[#allocation0]]
  $region38: #{tpu_custom_call.1} parent=0
    _
  %s8 = ssub.s32 1, %s6
  %s9 = scalar_select 0, %s8, %s6
  $region1: #{tpu_custom_call.1} parent=0
    #allocation3 [shape = 'u8[8192]{0}', space=vmem, size = 0x2000, scoped, tag = 'output window, operand 0, single buffered']
    #allocation4 [shape = 's32[1]{0}', space=sflag, size = 0x4, scoped, tag = 'scoped memory for tpu_custom_call.1']
    %10 = vsyncpa [#allocation4], 0
    // Predicated region
    $region2: #{tpu_custom_call.1} parent=1 // pred_check
      _
    $region3: #{tpu_custom_call.1} parent=1 // pred_check_branch
      %12 = sbr.rel (0) target = $region5
    $region4: #{tpu_custom_call.1} parent=1 // pred_region
      _
    $region5: #{tpu_custom_call.1} parent=1 // pred_fallthru
      _
    // Predicated region
    $region6: #{tpu_custom_call.1} parent=1 // pred_check
      _
    $region7: #{tpu_custom_call.1} parent=1 // pred_check_branch
      %14 = sbr.rel (0) target = $region9
    $region8: #{tpu_custom_call.1} parent=1 // pred_region
      _
    $region9: #{tpu_custom_call.1} parent=1 // pred_fallthru
      _
    // Predicated region
    $region10: #{tpu_custom_call.1} parent=1 // pred_check
      _
    $region11: #{tpu_custom_call.1} parent=1 // pred_check_branch
      %16 = sbr.rel (0) target = $region13
    $region12: #{tpu_custom_call.1} parent=1 // pred_region
      _
    $region13: #{tpu_custom_call.1} parent=1 // pred_fallthru
      _
    // Predicated region
    $region14: #{tpu_custom_call.1} parent=1 // pred_check
      _
    $region15: #{tpu_custom_call.1} parent=1 // pred_check_branch
      %18 = sbr.rel (0) target = $region17
    $region16: #{tpu_custom_call.1} parent=1 // pred_region
      _
    $region17: #{tpu_custom_call.1} parent=1 // pred_fallthru
      _
    // Predicated region
    $region18: #{tpu_custom_call.1} parent=1 // pred_check
      _
    $region19: #{tpu_custom_call.1} parent=1 // pred_check_branch
      %20 = sbr.rel (0) target = $region21
    $region20: #{tpu_custom_call.1} parent=1 // pred_region
      _
    $region21: #{tpu_custom_call.1} parent=1 // pred_fallthru
      _
    %p21 = scmp.eq.s32.totalorder 0, 0
    // Predicated region
    $region22: #{tpu_custom_call.1} parent=1 // pred_check
      %p22 = pneg %p21
    $region23: #{tpu_custom_call.1} parent=1 // pred_check_branch
      %24 = sbr.rel (%p22) target = $region25
    $region24: #{tpu_custom_call.1} parent=1 // pred_region
      %vm25 = vcmask 261120
      %26 = vst.msk [vmem:[#allocation2] sm:$0xff] %vm25, 0.0
      %27 = vst.msk [vmem:[#allocation2 + $0x8] sm:$0xff] %vm25, 0.0
    $region25: #{tpu_custom_call.1} parent=1 // pred_fallthru
      _
    %v28 = vld [vmem:[%s0] sm:$0xff]
    %v29 = vld [vmem:[%s0 + $0x8] sm:$0xff]
    %v30 = vld [vmem:[%s1] sm:$0xff]
    %v31 = vld [vmem:[%s1 + $0x8] sm:$0xff]
    %v32 = vld [vmem:[%s1 + $0x10] sm:$0xff]
    %v33 = vld [vmem:[%s1 + $0x18] sm:$0xff]
    %v34 = vld [vmem:[%s2] sm:$0x1]
    %v36 = vlaneseq
    %v37 = vshrl.u32 %v36, 7
    %v38 = vsub.s32 0, %v37
    %v39 = vrot.slane %v34, %v38
    %vm41 = vcmask 261120
    %v43 = vsel %vm41, %v28, 0
    %v46 = vsel %vm41, %v29, 0
    %48 = vmatprep.subr.mxu0 0.0
    %49 = vmatpush1.msra.mxu0 %v30
    %50 = vmatprep.subr.mxu0 0.0
    %51 = vmatpush1.msra.mxu0 %v31
    %52 = vmatprep.subr.mxu0 0.0
    %53 = vmatpush1.msra.mxu0 %v32
    %54 = vmatprep.subr.mxu0 0.0
    %55 = vmatpush1.msra.mxu0 %v33
    %56 = vmatprep.subr.mxu0 0.0
    %57 = vmatpush1.msra.mxu0 0.0
    %58 = vmatprep.subr.mxu0 0.0
    %59 = vmatpush1.msra.mxu0 0.0
    %60 = vmatprep.subr.mxu0 0.0
    %61 = vmatpush1.msra.mxu0 0.0
    %62 = vmatprep.subr.mxu0 0.0
    %63 = vmatpush1.msra.mxu0 0.0
    %64 = vmatprep.subr.mxu0 0.0
    %65 = vmatpush1.msra.mxu0 0.0
    %66 = vmatprep.subr.mxu0 0.0
    %67 = vmatpush1.msra.mxu0 0.0
    %68 = vmatprep.subr.mxu0 0.0
    %69 = vmatpush1.msra.mxu0 0.0
    %70 = vmatprep.subr.mxu0 0.0
    %71 = vmatpush1.msra.mxu0 0.0
    %72 = vmatprep.subr.mxu0 0.0
    %73 = vmatpush1.msra.mxu0 0.0
    %74 = vmatprep.subr.mxu0 0.0
    %75 = vmatpush1.msra.mxu0 0.0
    %76 = vmatprep.subr.mxu0 0.0
    %77 = vmatpush1.msra.mxu0 0.0
    %78 = vmatprep.subr.mxu0 0.0
    %79 = vmatpush1.msra.mxu0 0.0
    %80 = vmatprep.subr.mxu0 0.0
    %81 = vmatpush1.msra.mxu0 0.0
    %82 = vmatprep.subr.mxu0 0.0
    %83 = vmatpush1.msra.mxu0 0.0
    %84 = vmatprep.subr.mxu0 0.0
    %85 = vmatpush1.msra.mxu0 0.0
    %86 = vmatprep.subr.mxu0 0.0
    %87 = vmatpush1.msra.mxu0 0.0
    %88 = vmatprep.subr.mxu0 0.0
    %89 = vmatpush1.msra.mxu0 0.0
    %90 = vmatprep.subr.mxu0 0.0
    %91 = vmatpush1.msra.mxu0 0.0
    %92 = vmatprep.subr.mxu0 0.0
    %93 = vmatpush1.msra.mxu0 0.0
    %94 = vmatprep.subr.mxu0 0.0
    %95 = vmatpush1.msra.mxu0 0.0
    %96 = vmatprep.subr.mxu0 0.0
    %97 = vmatpush1.msra.mxu0 0.0
    %98 = vmatprep.subr.mxu0 0.0
    %99 = vmatpush1.msra.mxu0 0.0
    %100 = vmatprep.subr.mxu0 0.0
    %101 = vmatpush1.msra.mxu0 0.0
    %102 = vmatprep.subr.mxu0 0.0
    %103 = vmatpush1.msra.mxu0 0.0
    %104 = vmatprep.subr.mxu0 0.0
    %105 = vmatpush1.msra.mxu0 0.0
    %106 = vmatprep.subr.mxu0 0.0
    %107 = vmatpush1.msra.mxu0 0.0
    %108 = vmatprep.subr.mxu0 0.0
    %109 = vmatpush1.msra.mxu0 0.0
    %110 = vmatprep.subr.mxu0 0.0
    %111 = vmatpush1.msra.mxu0 0.0
    %112 = vmatprep.mubr.f32.mxu0 0.0
    %113 = vmatmul.mubr.f32.gmra.mrb[0].mxu0 %v43
    %v114 = vpop.f32.mrb[0].mxu0
    %v115 = vadd.f32 %v39, %v114
    %v116 = vpop.f32.mrb[0].mxu0
    %117 = vmatprep.mubr.f32.mxu0 0.0
    %118 = vmatmul.mubr.f32.gmra.mrb[0].mxu0 %v46
    %v119 = vpop.f32.mrb[0].mxu0
    %v120 = vadd.f32 %v39, %v119
    %v121 = vpop.f32.mrb[0].mxu0
    %122 = vdwg.mxu0
    %v123 = vmul.f32 %v115, 0.5
    %v124 = vmul.f32 %v120, 0.5
    %v125 = vmul.f32 %v115, 0.70710677
    %v126 = vmul.f32 %v120, 0.70710677
    %v127 = verf.f32.pop %v125
    %v128 = verf.f32.pop %v126
    %v129 = vadd.f32 %v127, 1.0
    %v130 = vadd.f32 %v128, 1.0
    %v131 = vmul.f32 %v123, %v129
    %v132 = vmul.f32 %v124, %v130
    %v133 = vld [vmem:[%s3] sm:$0xff]
    %v134 = vld [vmem:[%s3 + $0x8] sm:$0xff]
    %v135 = vld [vmem:[%s3 + $0x10] sm:$0xff]
    %v136 = vld [vmem:[%s3 + $0x18] sm:$0xff]
    %v137 = vld [vmem:[%s3 + $0x20] sm:$0xff]
    %v138 = vld [vmem:[%s3 + $0x28] sm:$0xff]
    %v139 = vld [vmem:[%s3 + $0x30] sm:$0xff]
    %v140 = vld [vmem:[%s3 + $0x38] sm:$0xff]
    %v141 = vld [vmem:[%s3 + $0x40] sm:$0xff]
    %v142 = vld [vmem:[%s3 + $0x48] sm:$0xff]
    %v143 = vld [vmem:[%s3 + $0x50] sm:$0xff]
    %v144 = vld [vmem:[%s3 + $0x58] sm:$0xff]
    %v145 = vld [vmem:[%s3 + $0x60] sm:$0xff]
    %v146 = vld [vmem:[%s3 + $0x68] sm:$0xff]
    %v147 = vld [vmem:[%s3 + $0x70] sm:$0xff]
    %v148 = vld [vmem:[%s3 + $0x78] sm:$0xff]
    %v149 = vld [vmem:[#allocation2] sm:$0xff]
    %v150 = vld [vmem:[#allocation2 + $0x8] sm:$0xff]
    %151 = vmatprep.subr.mxu0 0.0
    %152 = vmatpush1.msra.mxu0 %v133
    %153 = vmatprep.subr.mxu0 0.0
    %154 = vmatpush1.msra.mxu0 %v134
    %155 = vmatprep.subr.mxu0 0.0
    %156 = vmatpush1.msra.mxu0 %v135
    %157 = vmatprep.subr.mxu0 0.0
    %158 = vmatpush1.msra.mxu0 %v136
    %159 = vmatprep.subr.mxu0 0.0
    %160 = vmatpush1.msra.mxu0 %v137
    %161 = vmatprep.subr.mxu0 0.0
    %162 = vmatpush1.msra.mxu0 %v138
    %163 = vmatprep.subr.mxu0 0.0
    %164 = vmatpush1.msra.mxu0 %v139
    %165 = vmatprep.subr.mxu0 0.0
    %166 = vmatpush1.msra.mxu0 %v140
    %167 = vmatprep.subr.mxu0 0.0
    %168 = vmatpush1.msra.mxu0 %v141
    %169 = vmatprep.subr.mxu0 0.0
    %170 = vmatpush1.msra.mxu0 %v142
    %171 = vmatprep.subr.mxu0 0.0
    %172 = vmatpush1.msra.mxu0 %v143
    %173 = vmatprep.subr.mxu0 0.0
    %174 = vmatpush1.msra.mxu0 %v144
    %175 = vmatprep.subr.mxu0 0.0
    %176 = vmatpush1.msra.mxu0 %v145
    %177 = vmatprep.subr.mxu0 0.0
    %178 = vmatpush1.msra.mxu0 %v146
    %179 = vmatprep.subr.mxu0 0.0
    %180 = vmatpush1.msra.mxu0 %v147
    %181 = vmatprep.subr.mxu0 0.0
    %182 = vmatpush1.msra.mxu0 %v148
    %183 = vmatprep.subr.mxu0 0.0
    %184 = vmatpush1.msra.mxu0 0.0
    %185 = vmatprep.subr.mxu0 0.0
    %186 = vmatpush1.msra.mxu0 0.0
    %187 = vmatprep.subr.mxu0 0.0
    %188 = vmatpush1.msra.mxu0 0.0
    %189 = vmatprep.subr.mxu0 0.0
    %190 = vmatpush1.msra.mxu0 0.0
    %191 = vmatprep.subr.mxu0 0.0
    %192 = vmatpush1.msra.mxu0 0.0
    %193 = vmatprep.subr.mxu0 0.0
    %194 = vmatpush1.msra.mxu0 0.0
    %195 = vmatprep.subr.mxu0 0.0
    %196 = vmatpush1.msra.mxu0 0.0
    %197 = vmatprep.subr.mxu0 0.0
    %198 = vmatpush1.msra.mxu0 0.0
    %199 = vmatprep.subr.mxu0 0.0
    %200 = vmatpush1.msra.mxu0 0.0
    %201 = vmatprep.subr.mxu0 0.0
    %202 = vmatpush1.msra.mxu0 0.0
    %203 = vmatprep.subr.mxu0 0.0
    %204 = vmatpush1.msra.mxu0 0.0
    %205 = vmatprep.subr.mxu0 0.0
    %206 = vmatpush1.msra.mxu0 0.0
    %207 = vmatprep.subr.mxu0 0.0
    %208 = vmatpush1.msra.mxu0 0.0
    %209 = vmatprep.subr.mxu0 0.0
    %210 = vmatpush1.msra.mxu0 0.0
    %211 = vmatprep.subr.mxu0 0.0
    %212 = vmatpush1.msra.mxu0 0.0
    %213 = vmatprep.subr.mxu0 0.0
    %214 = vmatpush1.msra.mxu0 0.0
    %215 = vmatprep.mubr.f32.mxu0 0.0
    %216 = vmatmul.mubr.f32.gmra.mrb[0].mxu0 %v131
    %v217 = vpop.f32.mrb[0].mxu0
    %v218 = vadd.f32 0.0, %v217
    %v219 = vpop.f32.mrb[0].mxu0
    %220 = vmatprep.mubr.f32.mxu0 0.0
    %221 = vmatmul.mubr.f32.gmra.mrb[0].mxu0 %v132
    %v222 = vpop.f32.mrb[0].mxu0
    %v223 = vadd.f32 0.0, %v222
    %v224 = vpop.f32.mrb[0].mxu0
    %225 = vdwg.mxu0
    %v226 = vadd.f32 %v149, %v218
    %v227 = vadd.f32 %v150, %v223
    %228 = vst.msk [vmem:[#allocation2] sm:$0xff] %vm41, %v226
    %229 = vst.msk [vmem:[#allocation2 + $0x8] sm:$0xff] %vm41, %v227
    // Predicated region
    $region26: #{tpu_custom_call.1} parent=1 // pred_check
      %p230 = pneg %p21
    $region27: #{tpu_custom_call.1} parent=1 // pred_check_branch
      %232 = sbr.rel (%p230) target = $region29
    $region28: #{tpu_custom_call.1} parent=1 // pred_region
      %v233 = vld [vmem:[#allocation2] sm:$0xff]
      %v234 = vld [vmem:[#allocation2 + $0x8] sm:$0xff]
      %v235 = vld [vmem:[%s4] sm:$0x1]
      %v237 = vlaneseq
      %v238 = vshrl.u32 %v237, 7
      %v239 = vsub.s32 0, %v238
      %v240 = vrot.slane %v235, %v239
      %v242 = vadd.f32 %v233, %v240
      %v243 = vadd.f32 %v234, %v240
      %244 = vst.msk [vmem:[#allocation3] sm:$0xff] %vm41, %v242
      %245 = vst.msk [vmem:[#allocation3 + $0x8] sm:$0xff] %vm41, %v243
    $region29: #{tpu_custom_call.1} parent=1 // pred_fallthru
      _
    // Predicated region
    $region30: #{tpu_custom_call.1} parent=1 // pred_check
      _
    $region31: #{tpu_custom_call.1} parent=1 // pred_check_branch
      %247 = sbr.rel (0) target = $region33
    $region32: #{tpu_custom_call.1} parent=1 // pred_region
      %s249 = ssub.s32 256, 256
      %250 = vsyncadd [#allocation4], %s249
      %s251 = sshll.u32 [#allocation3], 4
      %s252 = int_to_ptr.vmem [resolvable:$true] %s251
      %257 = dma.vmem_to_hbm [thread:$0]  %s252, 256, %s5, [#allocation4], 128, 128, 8
    $region33: #{tpu_custom_call.1} parent=1 // pred_fallthru
      _
    // Predicated region
    $region34: #{tpu_custom_call.1} parent=1 // pred_check
      _
    $region35: #{tpu_custom_call.1} parent=1 // pred_check_branch
      %259 = sbr.rel (0) target = $region37
    $region36: #{tpu_custom_call.1} parent=1 // pred_region
      %260 = dma.done [#allocation4], 256
    $region37: #{tpu_custom_call.1} parent=1 // pred_fallthru
      _
    %261 = vsyncpa [#allocation4], 1

</llo_original>
